<compile_context>
chip_gen: v5e
topology: v5e:2x2
jax: 0.10.0
libtpu: 0.0.40
codegen_flags: <defaults>
</compile_context>

<pallas_src>
import functools
import math

import jax
import jax.numpy as jnp
from jax.experimental import pallas as pl
from jax.experimental.pallas import tpu as pltpu

_INV_SQRT2 = 1.0 / math.sqrt(2.0)
_TANH_C0 = math.sqrt(2.0 / math.pi)


def _gelu(h, approximate):
    if approximate:
        # tanh approximation -> EUP (frees VPU slots); opt-in, default exact.
        return 0.5 * h * (1.0 + jnp.tanh(_TANH_C0 * (h + 0.044715 * h * h * h)))
    return 0.5 * h * (1.0 + jax.lax.erf(h * _INV_SQRT2))


def _token_learner_kernel(x_ref, w1_ref, b1_ref, w2_ref, b2_ref, o_ref, *,
                          block_b, n_tok, out_token, emb, t_chunk,
                          flatten_out, approximate_gelu):
    # x_ref : [block_b, N, emb]      activations for this batch block
    # w1_ref: [emb, T*emb]           resident: all T first-layer weights packed
    # b1_ref: [1, T*emb]             (f32)
    # w2_ref: [T*emb, T]             resident: block-diagonal second-layer weights
    # b2_ref: [1, T]                 (f32)
    # o_ref : [block_b, 1, T*emb] or [block_b, T, emb]
    x = x_ref[...]                                   # keep MXU dtype (bf16 typ.)
    rows = block_b * n_tok
    x2d = x.reshape(rows, emb)

    n_chunks = out_token // t_chunk
    wmap_chunks = []
    for c in range(n_chunks):
        if n_chunks == 1:
            w1_c, b1_c = w1_ref[...], b1_ref[...]
            w2_c, b2_c = w2_ref[...], b2_ref[...]
        else:
            h0, h1 = c * t_chunk * emb, (c + 1) * t_chunk * emb
            t0, t1 = c * t_chunk, (c + 1) * t_chunk
            w1_c = w1_ref[:, h0:h1]
            b1_c = b1_ref[:, h0:h1]
            w2_c = w2_ref[h0:h1, t0:t1]
            b2_c = b2_ref[:, t0:t1]

        # (1) first Linear for this chunk of heads: one wide MXU matmul.
        hidden = jnp.dot(x2d, w1_c, preferred_element_type=jnp.float32)
        hidden = hidden + b1_c.astype(jnp.float32)           # [rows, tc*emb]
        hidden = _gelu(hidden, approximate_gelu)

        # (2) per-head Linear(emb, 1) via block-diagonal weights (MXU).
        #     Operands in the activation dtype, f32 accumulation.
        wmap_c = jnp.dot(hidden.astype(x.dtype), w2_c,
                         preferred_element_type=jnp.float32)  # [rows, tc]
        wmap_chunks.append(wmap_c + b2_c.astype(jnp.float32))

    wmap = wmap_chunks[0] if n_chunks == 1 else jnp.concatenate(wmap_chunks, -1)

    # (3) weighted global average pool over N: batched [T, N] @ [N, emb] matmul.
    wmap3 = wmap.reshape(block_b, n_tok, out_token).astype(x.dtype)
    tokens = jax.lax.dot_general(
        wmap3, x,
        dimension_numbers=(((1,), (1,)), ((0,), (0,))),
        preferred_element_type=jnp.float32)                   # [Bb, T, emb]
    tokens = tokens * (1.0 / n_tok)

    if flatten_out:
        o_ref[...] = tokens.reshape(block_b, 1, out_token * emb).astype(o_ref.dtype)
    else:
        o_ref[...] = tokens.astype(o_ref.dtype)


def _resident_spec(shape):
    """Constant-index (resident) weight spec; single-buffered when supported."""
    index_map = lambda b: (0,) * len(shape)
    try:
        return pl.BlockSpec(shape, index_map, pipeline_mode=pl.Buffered(1))
    except (TypeError, AttributeError):
        return pl.BlockSpec(shape, index_map)


@functools.partial(jax.jit, static_argnames=("out_token", "block_b", "t_chunk",
                                             "use_bf16", "approximate_gelu"))
def token_learner(x, w1, b1, w2, b2, *, out_token, block_b=None, t_chunk=None,
                  use_bf16=True, approximate_gelu=False):
    """x: [B, N, emb]; w1: [T, emb, emb] oriented so y = x @ w1[t];
    b1: [T, emb]; w2: [T, emb]; b2: [T, 1].  Returns [B, T, emb] in x.dtype."""
    B, N, emb = x.shape
    T = out_token
    out_dtype = x.dtype

    compute_dtype = jnp.bfloat16 if use_bf16 else x.dtype
    act_bytes = jnp.dtype(compute_dtype).itemsize

    # --- head chunking: cap the f32 hidden intermediate per grid step. -------
    if t_chunk is None:
        rows_nominal = max(N, min(256, B * N))
        cap = max(1, (2 << 20) // max(1, rows_nominal * emb * 4))
        t_chunk = 1
        for d in range(1, T + 1):
            if T % d == 0 and d <= cap:
                t_chunk = d
    assert T % t_chunk == 0, "t_chunk must divide out_token"

    # --- batch-block heuristic: fill the MXU M dim, respect VMEM, keep >=2 ---
    #     grid steps so both v7x TensorCores get work.
    resident_bytes = (emb * T * emb + T * emb * T) * act_bytes + (T * emb + T) * 4

    def step_bytes(bb):
        x_blk = 2 * bb * N * emb * act_bytes              # double-buffered in
        out_blk = 2 * bb * T * emb * act_bytes            # double-buffered out
        hid = bb * N * t_chunk * emb * 4                  # f32 hidden chunk
        wm = bb * N * T * 4
        return x_blk + out_blk + hid + wm

    if block_b is None:
        row_target = 256                                  # 256-wide MXU (v6e/v7x)
        budget = max((12 << 20) - resident_bytes, 2 << 20)
        block_b = 1
        for cand in range(1, B + 1):
            if B % cand != 0:
                continue
            if B >= 2 and (B // cand) < 2:
                break                                     # keep both v7x TCs busy
            if step_bytes(cand) > budget:
                break
            block_b = cand
            if cand * N >= row_target:
                break
    assert B % block_b == 0, "block_b must divide batch"

    # --- pack weights so the kernel does single wide / block-diag matmuls. ---
    w1_flat = jnp.transpose(w1, (1, 0, 2)).reshape(emb, T * emb)    # y = x @ w1_flat
    b1_flat = b1.reshape(1, T * emb).astype(jnp.float32)
    eye = jnp.eye(T, dtype=w2.dtype)
    # Block-diagonal second linear.  For tiny emb this is T-times the MACs but
    # stays on the MXU; negligible overhead once emb >= 128.
    w2_bd = (w2[:, :, None] * eye[:, None, :]).reshape(T * emb, T)
    b2_row = b2.reshape(1, T).astype(jnp.float32)

    x_c = x.astype(compute_dtype)
    w1_flat = w1_flat.astype(compute_dtype)
    w2_bd = w2_bd.astype(compute_dtype)

    flatten_out = (emb % 128) != 0
    if flatten_out:
        out_shape = jax.ShapeDtypeStruct((B, 1, T * emb), out_dtype)
        out_spec = pl.BlockSpec((block_b, 1, T * emb), lambda b: (b, 0, 0))
    else:
        out_shape = jax.ShapeDtypeStruct((B, T, emb), out_dtype)
        out_spec = pl.BlockSpec((block_b, T, emb), lambda b: (b, 0, 0))

    # Advisory cost estimate (helps XLA schedule the wrapper-side packing).
    flops = 2 * B * N * T * emb * emb            # first Linear (all heads)
    flops += 2 * B * N * T * emb * t_chunk       # block-diag second Linear
    flops += 2 * B * T * N * emb                 # weighted pooling
    transcendentals = B * N * T * emb            # GELU
    bytes_accessed = (B * N * emb + B * T * emb) * act_bytes + resident_bytes
    cost = pl.CostEstimate(flops=flops, transcendentals=transcendentals,
                           bytes_accessed=bytes_accessed)

    vmem_est = resident_bytes + step_bytes(block_b)
    vmem_limit = int(min(48 << 20, max(16 << 20, 2 * vmem_est)))

    kernel = functools.partial(
        _token_learner_kernel, block_b=block_b, n_tok=N, out_token=T, emb=emb,
        t_chunk=t_chunk, flatten_out=flatten_out,
        approximate_gelu=approximate_gelu)

    out = pl.pallas_call(
        kernel,
        out_shape=out_shape,
        grid_spec=pltpu.PrefetchScalarGridSpec(
            num_scalar_prefetch=0,
            grid=(B // block_b,),
            in_specs=[
                pl.BlockSpec((block_b, N, emb), lambda b: (b, 0, 0)),  # x
                _resident_spec((emb, T * emb)),                        # W1 packed
                _resident_spec((1, T * emb)),                          # b1
                _resident_spec((T * emb, T)),                          # W2 block-diag
                _resident_spec((1, T)),                                # b2
            ],
            out_specs=out_spec,
        ),
        compiler_params=pltpu.CompilerParams(
            dimension_semantics=("parallel",),
            vmem_limit_bytes=vmem_limit),
        cost_estimate=cost,
    )(x_c, w1_flat, b1_flat, w2_bd, b2_row)

    if flatten_out:
        out = out.reshape(B, T, emb)
    return out


def token_learner_ref(x, w1, b1, w2, b2):
    """Pure-JAX f32 reference mirroring the PyTorch forward."""
    hidden = jnp.einsum("bne,tef->btnf", x, w1) + b1[:, None, :]     # [B,T,N,emb]
    hidden = 0.5 * hidden * (1.0 + jax.lax.erf(hidden / jnp.sqrt(2.0)))
    wmap = jnp.einsum("btne,te->btn", hidden, w2) + b2[:, 0][None, :, None]
    return jnp.mean(x[:, None, :, :] * wmap[..., None], axis=2)      # [B,T,emb]


if __name__ == "__main__":
    B, out_token, emb, ph, pw = 2, 8, 32, 4, 4
    N = ph * pw

    key = jax.random.PRNGKey(0)
    kx, k1, k2, k3, k4 = jax.random.split(key, 5)

    x = jax.random.normal(kx, (B, N, emb), dtype=jnp.float32)
    # Deterministic synthetic MLP parameters (one stacked set per output token).
    w1 = jax.random.normal(k1, (out_token, emb, emb), dtype=jnp.float32) * 0.1
    b1 = jax.random.normal(k2, (out_token, emb), dtype=jnp.float32) * 0.1
    w2 = jax.random.normal(k3, (out_token, emb), dtype=jnp.float32) * 0.1
    b2 = jax.random.normal(k4, (out_token, 1), dtype=jnp.float32) * 0.1

    out = token_learner(x, w1, b1, w2, b2, out_token=out_token)
    out = jax.block_until_ready(out)

    ref = token_learner_ref(x, w1, b1, w2, b2)
    assert out.shape == (B, out_token, emb)
    # bf16 MXU operands (f32 accumulation) -> tolerances loosened vs f32 ref.
    assert jnp.allclose(out.astype(jnp.float32), ref, rtol=2e-2, atol=2e-2)

    print("KERNEL_OK")
</pallas_src>

<mosaic_0001>
module attributes {stable_mosaic.version = 11 : i64} {
  func.func @_token_learner_kernel(%arg0: i32, %arg1: memref<1x16x32xbf16, #tpu.memory_space<vmem>>, %arg2: memref<32x256xbf16, #tpu.memory_space<vmem>>, %arg3: memref<1x256xf32, #tpu.memory_space<vmem>>, %arg4: memref<256x8xbf16, #tpu.memory_space<vmem>>, %arg5: memref<1x8xf32, #tpu.memory_space<vmem>>, %arg6: memref<1x1x256xf32, #tpu.memory_space<vmem>>) attributes {dimension_semantics = [#tpu.dimension_semantics<parallel>], iteration_bounds = array<i64: 2>, scalar_prefetch = 0 : i64, scratch_operands = 0 : i64, tpu.core_type = #tpu.core_type<tc>, window_params = [{transform_indices = @transform_0, window_bounds = array<i64: 1, 16, 32>}, {pipeline_mode = #tpu.pipeline_mode<synchronous>, transform_indices = @transform_1, window_bounds = array<i64: 32, 256>}, {pipeline_mode = #tpu.pipeline_mode<synchronous>, transform_indices = @transform_2, window_bounds = array<i64: 1, 256>}, {pipeline_mode = #tpu.pipeline_mode<synchronous>, transform_indices = @transform_3, window_bounds = array<i64: 256, 8>}, {pipeline_mode = #tpu.pipeline_mode<synchronous>, transform_indices = @transform_4, window_bounds = array<i64: 1, 8>}, {transform_indices = @transform_5, window_bounds = array<i64: 1, 1, 256>}]} {
    %c0 = arith.constant 0 : index
    %c0_0 = arith.constant 0 : index
    %c0_1 = arith.constant 0 : index
    %0 = vector.load %arg1[%c0, %c0_0, %c0_1] : memref<1x16x32xbf16, #tpu.memory_space<vmem>>, vector<1x16x32xbf16>
    %1 = vector.shape_cast %0 : vector<1x16x32xbf16> to vector<16x32xbf16>
    %c0_2 = arith.constant 0 : index
    %c0_3 = arith.constant 0 : index
    %2 = vector.load %arg2[%c0_2, %c0_3] : memref<32x256xbf16, #tpu.memory_space<vmem>>, vector<32x256xbf16>
    %c0_4 = arith.constant 0 : index
    %c0_5 = arith.constant 0 : index
    %3 = vector.load %arg3[%c0_4, %c0_5] : memref<1x256xf32, #tpu.memory_space<vmem>>, vector<1x256xf32>
    %c0_6 = arith.constant 0 : index
    %c0_7 = arith.constant 0 : index
    %4 = vector.load %arg4[%c0_6, %c0_7] : memref<256x8xbf16, #tpu.memory_space<vmem>>, vector<256x8xbf16>
    %c0_8 = arith.constant 0 : index
    %c0_9 = arith.constant 0 : index
    %5 = vector.load %arg5[%c0_8, %c0_9] : memref<1x8xf32, #tpu.memory_space<vmem>>, vector<1x8xf32>
    %cst = arith.constant dense<0.000000e+00> : vector<16x256xf32>
    %6 = tpu.matmul %1, %2, %cst {dimension_numbers = #tpu.dot_dimension_numbers<[1], [0], [0], [1], [0, 0, 1, 1], [], []>} : vector<16x32xbf16>, vector<32x256xbf16>, vector<16x256xf32> -> vector<16x256xf32>
    %7 = vector.broadcast %3 : vector<1x256xf32> to vector<16x256xf32>
    %8 = arith.addf %6, %7 : vector<16x256xf32>
    %cst_10 = arith.constant 5.000000e-01 : f32
    %9 = vector.broadcast %cst_10 : f32 to vector<16x256xf32>
    %10 = arith.mulf %9, %8 : vector<16x256xf32>
    %cst_11 = arith.constant 0.707106769 : f32
    %11 = vector.broadcast %cst_11 : f32 to vector<16x256xf32>
    %12 = arith.mulf %8, %11 : vector<16x256xf32>
    %13 = math.erf %12 : vector<16x256xf32>
    %cst_12 = arith.constant 1.000000e+00 : f32
    %14 = vector.broadcast %cst_12 : f32 to vector<16x256xf32>
    %15 = arith.addf %14, %13 : vector<16x256xf32>
    %16 = arith.mulf %10, %15 : vector<16x256xf32>
    %17 = arith.truncf %16 : vector<16x256xf32> to vector<16x256xbf16>
    %cst_13 = arith.constant dense<0.000000e+00> : vector<16x8xf32>
    %18 = tpu.matmul %17, %4, %cst_13 {dimension_numbers = #tpu.dot_dimension_numbers<[1], [0], [0], [1], [0, 0, 1, 1], [], []>} : vector<16x256xbf16>, vector<256x8xbf16>, vector<16x8xf32> -> vector<16x8xf32>
    %19 = vector.broadcast %5 : vector<1x8xf32> to vector<16x8xf32>
    %20 = arith.addf %18, %19 : vector<16x8xf32>
    %21 = vector.shape_cast %20 : vector<16x8xf32> to vector<1x16x8xf32>
    %22 = arith.truncf %21 : vector<1x16x8xf32> to vector<1x16x8xbf16>
    %cst_14 = arith.constant dense<0.000000e+00> : vector<1x8x32xf32>
    %23 = tpu.matmul %22, %0, %cst_14 {dimension_numbers = #tpu.dot_dimension_numbers<[1], [1], [2], [2], [0, 0, 0, 2, 1, 2], [0], [0]>} : vector<1x16x8xbf16>, vector<1x16x32xbf16>, vector<1x8x32xf32> -> vector<1x8x32xf32>
    %cst_15 = arith.constant 6.250000e-02 : f32
    %24 = vector.broadcast %cst_15 : f32 to vector<1x8x32xf32>
    %25 = arith.mulf %23, %24 : vector<1x8x32xf32>
    %26 = vector.shape_cast %25 : vector<1x8x32xf32> to vector<1x1x256xf32>
    %c0_16 = arith.constant 0 : index
    %c0_17 = arith.constant 0 : index
    %c0_18 = arith.constant 0 : index
    %27 = vector.load %arg6[%c0_16, %c0_17, %c0_18] : memref<1x1x256xf32, #tpu.memory_space<vmem>>, vector<1x1x256xf32>
    tpu.vector_store %arg6[%c0_16, %c0_17, %c0_18], %26 {strides = array<i32>} : memref<1x1x256xf32, #tpu.memory_space<vmem>>, vector<1x1x256xf32>,
    return
  }
  func.func @transform_0(%arg0: i32) -> (i32, i32, i32) {
    %c0_i32 = arith.constant 0 : i32
    %c0_i32_0 = arith.constant 0 : i32
    %c0_i32_1 = arith.constant 0 : i32
    return %arg0, %c0_i32, %c0_i32_0 : i32, i32, i32
  }
  func.func @transform_1(%arg0: i32) -> (i32, i32) {
    %c0_i32 = arith.constant 0 : i32
    %c0_i32_0 = arith.constant 0 : i32
    %c0_i32_1 = arith.constant 0 : i32
    return %c0_i32, %c0_i32_0 : i32, i32
  }
  func.func @transform_2(%arg0: i32) -> (i32, i32) {
    %c0_i32 = arith.constant 0 : i32
    %c0_i32_0 = arith.constant 0 : i32
    %c0_i32_1 = arith.constant 0 : i32
    return %c0_i32, %c0_i32_0 : i32, i32
  }
  func.func @transform_3(%arg0: i32) -> (i32, i32) {
    %c0_i32 = arith.constant 0 : i32
    %c0_i32_0 = arith.constant 0 : i32
    %c0_i32_1 = arith.constant 0 : i32
    return %c0_i32, %c0_i32_0 : i32, i32
  }
  func.func @transform_4(%arg0: i32) -> (i32, i32) {
    %c0_i32 = arith.constant 0 : i32
    %c0_i32_0 = arith.constant 0 : i32
    %c0_i32_1 = arith.constant 0 : i32
    return %c0_i32, %c0_i32_0 : i32, i32
  }
  func.func @transform_5(%arg0: i32) -> (i32, i32, i32) {
    %c0_i32 = arith.constant 0 : i32
    %c0_i32_0 = arith.constant 0 : i32
    %c0_i32_1 = arith.constant 0 : i32
    return %arg0, %c0_i32, %c0_i32_0 : i32, i32, i32
  }
}

</mosaic_0001>

<llo_original>
// kernel: token_learner.1
$region0: #{token_learner.1}
  #allocation0 [shape = 'u32[]', space=smem, size = 0x4, offset = 0x4, fixed_abs, tag = 'smem constant byte address 0x4 - core index']
  #allocation1 [shape = 'u32[72,128]{1,0:T(1,128)}', space=vmem, size = 0x9000, scoped, tag = 'internal scratch']
  %s0 = inlined_call_operand.vmem [shape: bf16[2,16,32], index: 0, kind: input, shape index: {}]
  %s1 = inlined_call_operand.vmem [shape: bf16[32,256], index: 1, kind: input, shape index: {}]
  %s2 = inlined_call_operand.vmem [shape: f32[1,256], index: 2, kind: input, shape index: {}]
  %s3 = inlined_call_operand.vmem [shape: bf16[256,8], index: 3, kind: input, shape index: {}]
  %s4 = inlined_call_operand.vmem [shape: f32[1,8], index: 4, kind: input, shape index: {}]
  %s5 = inlined_call_operand.vmem [shape: f32[2,1,256], index: 5, kind: output, shape index: {}]
  %s6 = sld [smem:[#allocation0]]
  $region53: #{token_learner.1} parent=0
    _
  %s8 = ssub.s32 1, %s6
  %s9 = scalar_select 0, %s8, %s6
  loop: start=0, step=1, limit=4
  $region2: #{token_learner.1} parent=0 // loop_pre_header
    _
  $region3: #{token_learner.1} parent=0 // loop_header
    %s11 = sphi 0, %s15
    %p12 = scmp.ge.s32.totalorder %s11, 4
    %s21 = sphi 0, %s23
    %s24 = sphi 0, %s21
    %s25 = sphi 0, %s24
    %s41 = sphi 0, %s25
    %s45 = sphi 0, %s45
    %s47 = sphi 0, %s45
    %s48 = sphi 0, %s47
    %s62 = sphi 0, %s48
    %s66 = sphi 0, %s66
    %s68 = sphi 0, %s66
    %s69 = sphi 0, %s68
    %s83 = sphi 0, %s69
    %s87 = sphi 0, %s87
    %s89 = sphi 0, %s87
    %s90 = sphi 0, %s89
    %s104 = sphi 0, %s90
    %s108 = sphi 0, %s108
    %s110 = sphi 0, %s108
    %s111 = sphi 0, %s110
    %s125 = sphi 0, %s111
    %s131 = sphi 0, %s133
    %s134 = sphi 0, %s131
    %s135 = sphi 0, %s134
    %s151 = sphi 0, %s135
  $region4: #{token_learner.1} parent=0 // loop_header_branch
    %14 = sbr.rel (%p12) target = $region8
  $region5: #{token_learner.1} parent=0 // loop_body
    %s16 = ssub.s32 %s11, 1
    %s17 = ssub.s32 %s11, 2
    %s18 = sadd.s32 %s11, 1
    %s19 = ssub.s32 %s11, %s18
    %p20 = scmp.eq.s32.totalorder %s19, 0
    %s22 = sadd.s32 %s21, 1
    %s23 = scalar_select %p20, %s21, %s22
    %p26 = pneg %p20
    %p27 = scmp.eq.s32.totalorder %s11, 1
    %p28 = por %p26, %p27
    %p29 = scmp.ne.s32.totalorder %s21, %s24
    %p30 = scmp.eq.s32.totalorder %s11, 0
    %p31 = por %p29, %p30
    %p32 = scmp.ne.s32.totalorder %s21, %s24
    %p33 = scmp.eq.s32.totalorder %s16, 1
    %p34 = por %p32, %p33
    %p35 = scmp.ne.s32.totalorder %s24, %s25
    %p36 = scmp.eq.s32.totalorder %s16, 0
    %p37 = por %p35, %p36
    %p38 = scmp.ne.s32.totalorder %s24, %s25
    %p39 = scmp.eq.s32.totalorder %s17, 1
    %p40 = por %p38, %p39
    %p42 = scmp.ne.s32.totalorder %s25, %s41
    %p43 = scmp.eq.s32.totalorder %s17, 0
    %p44 = por %p42, %p43
    %s46 = sadd.s32 %s45, 1
    %p49 = scmp.eq.s32.totalorder %s11, 1
    %p50 = scmp.ne.s32.totalorder %s45, %s47
    %p51 = scmp.eq.s32.totalorder %s11, 0
    %p52 = por %p50, %p51
    %p53 = scmp.ne.s32.totalorder %s45, %s47
    %p54 = scmp.eq.s32.totalorder %s16, 1
    %p55 = por %p53, %p54
    %p56 = scmp.ne.s32.totalorder %s47, %s48
    %p57 = scmp.eq.s32.totalorder %s16, 0
    %p58 = por %p56, %p57
    %p59 = scmp.ne.s32.totalorder %s47, %s48
    %p60 = scmp.eq.s32.totalorder %s17, 1
    %p61 = por %p59, %p60
    %p63 = scmp.ne.s32.totalorder %s48, %s62
    %p64 = scmp.eq.s32.totalorder %s17, 0
    %p65 = por %p63, %p64
    %s67 = sadd.s32 %s66, 1
    %p70 = scmp.eq.s32.totalorder %s11, 1
    %p71 = scmp.ne.s32.totalorder %s66, %s68
    %p72 = scmp.eq.s32.totalorder %s11, 0
    %p73 = por %p71, %p72
    %p74 = scmp.ne.s32.totalorder %s66, %s68
    %p75 = scmp.eq.s32.totalorder %s16, 1
    %p76 = por %p74, %p75
    %p77 = scmp.ne.s32.totalorder %s68, %s69
    %p78 = scmp.eq.s32.totalorder %s16, 0
    %p79 = por %p77, %p78
    %p80 = scmp.ne.s32.totalorder %s68, %s69
    %p81 = scmp.eq.s32.totalorder %s17, 1
    %p82 = por %p80, %p81
    %p84 = scmp.ne.s32.totalorder %s69, %s83
    %p85 = scmp.eq.s32.totalorder %s17, 0
    %p86 = por %p84, %p85
    %s88 = sadd.s32 %s87, 1
    %p91 = scmp.eq.s32.totalorder %s11, 1
    %p92 = scmp.ne.s32.totalorder %s87, %s89
    %p93 = scmp.eq.s32.totalorder %s11, 0
    %p94 = por %p92, %p93
    %p95 = scmp.ne.s32.totalorder %s87, %s89
    %p96 = scmp.eq.s32.totalorder %s16, 1
    %p97 = por %p95, %p96
    %p98 = scmp.ne.s32.totalorder %s89, %s90
    %p99 = scmp.eq.s32.totalorder %s16, 0
    %p100 = por %p98, %p99
    %p101 = scmp.ne.s32.totalorder %s89, %s90
    %p102 = scmp.eq.s32.totalorder %s17, 1
    %p103 = por %p101, %p102
    %p105 = scmp.ne.s32.totalorder %s90, %s104
    %p106 = scmp.eq.s32.totalorder %s17, 0
    %p107 = por %p105, %p106
    %s109 = sadd.s32 %s108, 1
    %p112 = scmp.eq.s32.totalorder %s11, 1
    %p113 = scmp.ne.s32.totalorder %s108, %s110
    %p114 = scmp.eq.s32.totalorder %s11, 0
    %p115 = por %p113, %p114
    %p116 = scmp.ne.s32.totalorder %s108, %s110
    %p117 = scmp.eq.s32.totalorder %s16, 1
    %p118 = por %p116, %p117
    %p119 = scmp.ne.s32.totalorder %s110, %s111
    %p120 = scmp.eq.s32.totalorder %s16, 0
    %p121 = por %p119, %p120
    %p122 = scmp.ne.s32.totalorder %s110, %s111
    %p123 = scmp.eq.s32.totalorder %s17, 1
    %p124 = por %p122, %p123
    %p126 = scmp.ne.s32.totalorder %s111, %s125
    %p127 = scmp.eq.s32.totalorder %s17, 0
    %p128 = por %p126, %p127
    %s129 = ssub.s32 %s11, %s18
    %p130 = scmp.eq.s32.totalorder %s129, 0
    %s132 = sadd.s32 %s131, 1
    %s133 = scalar_select %p130, %s131, %s132
    %p136 = pneg %p130
    %p137 = scmp.eq.s32.totalorder %s11, 1
    %p138 = por %p136, %p137
    %p139 = scmp.ne.s32.totalorder %s131, %s134
    %p140 = scmp.eq.s32.totalorder %s11, 0
    %p141 = por %p139, %p140
    %p142 = scmp.ne.s32.totalorder %s131, %s134
    %p143 = scmp.eq.s32.totalorder %s16, 1
    %p144 = por %p142, %p143
    %p145 = scmp.ne.s32.totalorder %s134, %s135
    %p146 = scmp.eq.s32.totalorder %s16, 0
    %p147 = por %p145, %p146
    %p148 = scmp.ne.s32.totalorder %s134, %s135
    %p149 = scmp.eq.s32.totalorder %s17, 1
    %p150 = por %p148, %p149
    %p152 = scmp.ne.s32.totalorder %s135, %s151
    %p153 = scmp.eq.s32.totalorder %s17, 0
    %p154 = por %p152, %p153
    %p155 = scmp.le.s32.totalorder 1, %s11
    %p156 = scmp.lt.s32.totalorder %s11, 3
    %p157 = pnand %p155, %p156
    %p158 = pneg %p157
    // Predicated region
    $region9: #{token_learner.1} parent=5 // pred_check
      _
    $region10: #{token_learner.1} parent=5 // pred_check_branch
      %160 = sbr.rel (%p157) target = $region12
    $region11: #{token_learner.1} parent=5 // pred_region
      %s161 = ssub.s32 %s11, 1
      // Predicated region
      $region13: #{token_learner.1} parent=11 // pred_check
        %p162 = pneg %p58
      $region14: #{token_learner.1} parent=11 // pred_check_branch
        %164 = sbr.rel (%p162) target = $region16
      $region15: #{token_learner.1} parent=11 // pred_region
        _
      $region16: #{token_learner.1} parent=11 // pred_fallthru
        _
      // Predicated region
      $region17: #{token_learner.1} parent=11 // pred_check
        %p165 = pneg %p79
      $region18: #{token_learner.1} parent=11 // pred_check_branch
        %167 = sbr.rel (%p165) target = $region20
      $region19: #{token_learner.1} parent=11 // pred_region
        _
      $region20: #{token_learner.1} parent=11 // pred_fallthru
        _
      // Predicated region
      $region21: #{token_learner.1} parent=11 // pred_check
        %p168 = pneg %p100
      $region22: #{token_learner.1} parent=11 // pred_check_branch
        %170 = sbr.rel (%p168) target = $region24
      $region23: #{token_learner.1} parent=11 // pred_region
        _
      $region24: #{token_learner.1} parent=11 // pred_fallthru
        _
      // Predicated region
      $region25: #{token_learner.1} parent=11 // pred_check
        %p171 = pneg %p121
      $region26: #{token_learner.1} parent=11 // pred_check_branch
        %173 = sbr.rel (%p171) target = $region28
      $region27: #{token_learner.1} parent=11 // pred_region
        _
      $region28: #{token_learner.1} parent=11 // pred_fallthru
        _
    $region12: #{token_learner.1} parent=5 // pred_fallthru
      _
    %p174 = scmp.lt.s32.totalorder %s11, 2
    // Predicated region
    $region29: #{token_learner.1} parent=5 // pred_check
      %p175 = pneg %p174
    $region30: #{token_learner.1} parent=5 // pred_check_branch
      %177 = sbr.rel (%p175) target = $region32
    $region31: #{token_learner.1} parent=5 // pred_region
      // Predicated region
      $region33: #{token_learner.1} parent=31 // pred_check
        %p178 = pneg %p31
      $region34: #{token_learner.1} parent=31 // pred_check_branch
        %180 = sbr.rel (%p178) target = $region36
      $region35: #{token_learner.1} parent=31 // pred_region
        %p181 = scmp.lt.s32.totalorder %s11, 1
        %s182 = scalar_select %p181, %s11, 1
        %s183 = smul.addr %s182, 2
        %s184 = smul.addr %s183, 4
        %s185 = scalar_lea.vmem %s0, %s184
      $region36: #{token_learner.1} parent=31 // pred_fallthru
        _
    $region32: #{token_learner.1} parent=5 // pred_fallthru
      _
    %p186 = scmp.le.s32.totalorder 1, %s11
    %p187 = scmp.lt.s32.totalorder %s11, 3
    %p188 = pnand %p186, %p187
    %p189 = pneg %p188
    // Predicated region
    $region37: #{token_learner.1} parent=5 // pred_check
      _
    $region38: #{token_learner.1} parent=5 // pred_check_branch
      %191 = sbr.rel (%p188) target = $region40
    $region39: #{token_learner.1} parent=5 // pred_region
      %s192 = ssub.s32 %s11, 1
      %p193 = scmp.lt.s32.totalorder %s16, 1
      %s194 = scalar_select %p193, %s16, 1
      %s195 = smul.addr %s194, 2
      %s196 = smul.addr %s195, 4
      %s197 = scalar_lea.vmem %s0, %s196
      %p198 = pneg %p37
      %p199 = pneg %p34
      %p200 = pneg %p58
      %p201 = pneg %p55
      %p202 = pneg %p79
      %p203 = pneg %p76
      %p204 = pneg %p100
      %p205 = pneg %p97
      %p206 = pneg %p121
      %p207 = pneg %p118
      %p208 = pneg %p147
      %p209 = pneg %p144
      %p210 = scmp.lt.s32.totalorder %s16, 1
      %s211 = scalar_select %p210, %s16, 1
      %s212 = smul.addr %s211, 2
      %s213 = scalar_lea.vmem %s5, %s212
      %p214 = scmp.lt.s32.totalorder %s16, 1
      %s215 = scalar_select %p214, %s16, 1
      %s216 = smul.addr %s215, 2
      %s217 = smul.addr %s216, 4
      %s218 = scalar_lea.vmem %s0, %s217
      %p219 = scmp.lt.s32.totalorder %s16, 1
      %s220 = scalar_select %p219, %s16, 1
      %s221 = smul.addr %s220, 2
      %s222 = scalar_lea.vmem %s5, %s221
      %v224 = vld [vmem:[%s218] sm:$0xf]
      %v225 = vld [vmem:[%s218 + $0x4] sm:$0xf]
      %v226 = vld [vmem:[%s1] sm:$0xff]
      %v227 = vld [vmem:[%s1 + $0x8] sm:$0xff]
      %v228 = vld [vmem:[%s1 + $0x10] sm:$0xff]
      %v229 = vld [vmem:[%s1 + $0x18] sm:$0xff]
      %v230 = vld [vmem:[%s2] sm:$0x3]
      %v231 = vld [vmem:[%s3] sm:$0xf]
      %v232 = vld [vmem:[%s3 + $0x4] sm:$0xf]
      %v233 = vld [vmem:[%s3 + $0x8] sm:$0xf]
      %v234 = vld [vmem:[%s3 + $0xc] sm:$0xf]
      %v235 = vld [vmem:[%s3 + $0x10] sm:$0xf]
      %v236 = vld [vmem:[%s3 + $0x14] sm:$0xf]
      %v237 = vld [vmem:[%s3 + $0x18] sm:$0xf]
      %v238 = vld [vmem:[%s3 + $0x1c] sm:$0xf]
      %v239 = vld [vmem:[%s3 + $0x20] sm:$0xf]
      %v240 = vld [vmem:[%s3 + $0x24] sm:$0xf]
      %v241 = vld [vmem:[%s3 + $0x28] sm:$0xf]
      %v242 = vld [vmem:[%s3 + $0x2c] sm:$0xf]
      %v243 = vld [vmem:[%s3 + $0x30] sm:$0xf]
      %v244 = vld [vmem:[%s3 + $0x34] sm:$0xf]
      %v245 = vld [vmem:[%s3 + $0x38] sm:$0xf]
      %v246 = vld [vmem:[%s3 + $0x3c] sm:$0xf]
      %v247 = vld [vmem:[%s3 + $0x40] sm:$0xf]
      %v248 = vld [vmem:[%s3 + $0x44] sm:$0xf]
      %v249 = vld [vmem:[%s3 + $0x48] sm:$0xf]
      %v250 = vld [vmem:[%s3 + $0x4c] sm:$0xf]
      %v251 = vld [vmem:[%s3 + $0x50] sm:$0xf]
      %v252 = vld [vmem:[%s3 + $0x54] sm:$0xf]
      %v253 = vld [vmem:[%s3 + $0x58] sm:$0xf]
      %v254 = vld [vmem:[%s3 + $0x5c] sm:$0xf]
      %v255 = vld [vmem:[%s3 + $0x60] sm:$0xf]
      %v256 = vld [vmem:[%s3 + $0x64] sm:$0xf]
      %v257 = vld [vmem:[%s3 + $0x68] sm:$0xf]
      %v258 = vld [vmem:[%s3 + $0x6c] sm:$0xf]
      %v259 = vld [vmem:[%s3 + $0x70] sm:$0xf]
      %v260 = vld [vmem:[%s3 + $0x74] sm:$0xf]
      %v261 = vld [vmem:[%s3 + $0x78] sm:$0xf]
      %v262 = vld [vmem:[%s3 + $0x7c] sm:$0xf]
      %v263 = vld [vmem:[%s4] sm:$0x1]
      %v265 = vperm.slane %v230, 0
      %v266 = vperm.slane %v230, 1
      %v271 = vunpack.c.l.b16 %v224
      %v272 = vunpack.c.l.b16 %v225
      %v273 = vpack.c.b16 %v272, %v271
      %v278 = vunpack.c.l.b16 %v226
      %v279 = vunpack.c.h.b16 %v226
      %v280 = vunpack.c.l.b16 %v227
      %v281 = vunpack.c.h.b16 %v227
      %v282 = vunpack.c.l.b16 %v228
      %v283 = vunpack.c.h.b16 %v228
      %v284 = vunpack.c.l.b16 %v229
      %v285 = vunpack.c.h.b16 %v229
      %v286 = vpack.c.b16 %v280, %v278
      %v287 = vpack.c.b16 %v281, %v279
      %v288 = vpack.c.b16 %v284, %v282
      %v289 = vpack.c.b16 %v285, %v283
      %vm294 = vcmask 261120
      %v296 = vsel %vm294, %v273, 0
      %298 = vmatpush.bf16.msra.mxu0 0
      %299 = vmatpush.bf16.msra.mxu0 0
      %300 = vmatpush.bf16.msra.mxu0 0
      %301 = vmatpush.bf16.msra.mxu0 0
      %302 = vmatpush.bf16.msra.mxu0 0
      %303 = vmatpush.bf16.msra.mxu0 0
      %304 = vmatpush.bf16.msra.mxu0 %v288
      %305 = vmatpush.bf16.msra.mxu0 %v286
      %306 = vmatmul.bf16.gmra.mxu0 %v296
      %v307 = vpop.f32.mrf.mxu0
      %v308 = vadd.f32 %v265, %v307
      %v309 = vpop.f32.mrf.mxu0
      %v310 = vadd.f32 %v265, %v309
      %311 = vdwg.mxu0
      %312 = vmatpush.bf16.msra.mxu0 0
      %313 = vmatpush.bf16.msra.mxu0 0
      %314 = vmatpush.bf16.msra.mxu0 0
      %315 = vmatpush.bf16.msra.mxu0 0
      %316 = vmatpush.bf16.msra.mxu0 0
      %317 = vmatpush.bf16.msra.mxu0 0
      %318 = vmatpush.bf16.msra.mxu0 %v289
      %319 = vmatpush.bf16.msra.mxu0 %v287
      %320 = vmatmul.bf16.gmra.mxu0 %v296
      %v321 = vpop.f32.mrf.mxu0
      %v322 = vadd.f32 %v266, %v321
      %v323 = vpop.f32.mrf.mxu0
      %v324 = vadd.f32 %v266, %v323
      %325 = vdwg.mxu0
      %v326 = vmul.f32 %v308, 0.5
      %v327 = vmul.f32 %v322, 0.5
      %v328 = vmul.f32 %v310, 0.5
      %v329 = vmul.f32 %v324, 0.5
      %v330 = vmul.f32 %v308, 0.70710677
      %v331 = vmul.f32 %v322, 0.70710677
      %v332 = vmul.f32 %v310, 0.70710677
      %v333 = vmul.f32 %v324, 0.70710677
      %v334 = vmul.f32 %v330, %v330
      %v335 = vmin.f32 16.0, %v334
      %v336 = vmul.f32 %v335, 2.1237322e-06
      %v337 = vadd.f32 %v336, 0.00028619796
      %v338 = vmul.f32 %v335, %v337
      %v339 = vadd.f32 %v338, 0.0036580483
      %v340 = vmul.f32 %v335, %v339
      %v341 = vadd.f32 %v340, 0.05243302
      %v342 = vmul.f32 %v335, %v341
      %v343 = vadd.f32 %v342, 0.18741608
      %v344 = vmul.f32 %v335, %v343
      %v345 = vadd.f32 %v344, 1.1283791
      %v346 = vmul.f32 %v330, %v345
      %v347 = vmul.f32 %v335, 3.8918573e-05
      %v348 = vadd.f32 %v347, 0.001143296
      %v349 = vmul.f32 %v335, %v348
      %v350 = vadd.f32 %v349, 0.014752088
      %v351 = vmul.f32 %v335, %v350
      %v352 = vadd.f32 %v351, 0.112945676
      %v353 = vmul.f32 %v335, %v352
      %v354 = vadd.f32 %v353, 0.4994258
      %v355 = vmul.f32 %v335, %v354
      %v356 = vadd.f32 %v355, 1.0
      %v357 = vrcp.pop %v356
      %v358 = vmul.f32 %v356, %v357
      %v359 = vsub.f32 1.0, %v358
      %v360 = vmul.f32 %v357, %v359
      %v361 = vadd.f32 %v357, %v360
      %vm362 = vweird.f32 %v356
      %vm363 = vweird.f32 %v357
      %vm364 = vmor %vm362, %vm363
      %v365 = vsel %vm364, %v357, %v361
      %v366 = vand.u32 2147483647, %v356
      %vm367 = vcmp.eq.f32.partialorder %v366, 8.507059e+37
      %v368 = vand.u32 %v356, 2147483648
      %v369 = vor.u32 1.1754944e-38, %v368
      %v370 = vsel %vm367, %v369, %v365
      %v371 = vmul.f32 %v346, %v370
      %v372 = vmin.f32 %v371, 1.0
      %v373 = vmax.f32 %v372, -1.0
      %v374 = vmul.f32 %v331, %v331
      %v375 = vmin.f32 16.0, %v374
      %v376 = vmul.f32 %v375, 2.1237322e-06
      %v377 = vadd.f32 %v376, 0.00028619796
      %v378 = vmul.f32 %v375, %v377
      %v379 = vadd.f32 %v378, 0.0036580483
      %v380 = vmul.f32 %v375, %v379
      %v381 = vadd.f32 %v380, 0.05243302
      %v382 = vmul.f32 %v375, %v381
      %v383 = vadd.f32 %v382, 0.18741608
      %v384 = vmul.f32 %v375, %v383
      %v385 = vadd.f32 %v384, 1.1283791
      %v386 = vmul.f32 %v331, %v385
      %v387 = vmul.f32 %v375, 3.8918573e-05
      %v388 = vadd.f32 %v387, 0.001143296
      %v389 = vmul.f32 %v375, %v388
      %v390 = vadd.f32 %v389, 0.014752088
      %v391 = vmul.f32 %v375, %v390
      %v392 = vadd.f32 %v391, 0.112945676
      %v393 = vmul.f32 %v375, %v392
      %v394 = vadd.f32 %v393, 0.4994258
      %v395 = vmul.f32 %v375, %v394
      %v396 = vadd.f32 %v395, 1.0
      %v397 = vrcp.pop %v396
      %v398 = vmul.f32 %v396, %v397
      %v399 = vsub.f32 1.0, %v398
      %v400 = vmul.f32 %v397, %v399
      %v401 = vadd.f32 %v397, %v400
      %vm402 = vweird.f32 %v396
      %vm403 = vweird.f32 %v397
      %vm404 = vmor %vm402, %vm403
      %v405 = vsel %vm404, %v397, %v401
      %v406 = vand.u32 2147483647, %v396
      %vm407 = vcmp.eq.f32.partialorder %v406, 8.507059e+37
      %v408 = vand.u32 %v396, 2147483648
      %v409 = vor.u32 1.1754944e-38, %v408
      %v410 = vsel %vm407, %v409, %v405
      %v411 = vmul.f32 %v386, %v410
      %v412 = vmin.f32 %v411, 1.0
      %v413 = vmax.f32 %v412, -1.0
      %v414 = vmul.f32 %v332, %v332
      %v415 = vmin.f32 16.0, %v414
      %v416 = vmul.f32 %v415, 2.1237322e-06
      %v417 = vadd.f32 %v416, 0.00028619796
      %v418 = vmul.f32 %v415, %v417
      %v419 = vadd.f32 %v418, 0.0036580483
      %v420 = vmul.f32 %v415, %v419
      %v421 = vadd.f32 %v420, 0.05243302
      %v422 = vmul.f32 %v415, %v421
      %v423 = vadd.f32 %v422, 0.18741608
      %v424 = vmul.f32 %v415, %v423
      %v425 = vadd.f32 %v424, 1.1283791
      %v426 = vmul.f32 %v332, %v425
      %v427 = vmul.f32 %v415, 3.8918573e-05
      %v428 = vadd.f32 %v427, 0.001143296
      %v429 = vmul.f32 %v415, %v428
      %v430 = vadd.f32 %v429, 0.014752088
      %v431 = vmul.f32 %v415, %v430
      %v432 = vadd.f32 %v431, 0.112945676
      %v433 = vmul.f32 %v415, %v432
      %v434 = vadd.f32 %v433, 0.4994258
      %v435 = vmul.f32 %v415, %v434
      %v436 = vadd.f32 %v435, 1.0
      %v437 = vrcp.pop %v436
      %v438 = vmul.f32 %v436, %v437
      %v439 = vsub.f32 1.0, %v438
      %v440 = vmul.f32 %v437, %v439
      %v441 = vadd.f32 %v437, %v440
      %vm442 = vweird.f32 %v436
      %vm443 = vweird.f32 %v437
      %vm444 = vmor %vm442, %vm443
      %v445 = vsel %vm444, %v437, %v441
      %v446 = vand.u32 2147483647, %v436
      %vm447 = vcmp.eq.f32.partialorder %v446, 8.507059e+37
      %v448 = vand.u32 %v436, 2147483648
      %v449 = vor.u32 1.1754944e-38, %v448
      %v450 = vsel %vm447, %v449, %v445
      %v451 = vmul.f32 %v426, %v450
      %v452 = vmin.f32 %v451, 1.0
      %v453 = vmax.f32 %v452, -1.0
      %v454 = vmul.f32 %v333, %v333
      %v455 = vmin.f32 16.0, %v454
      %v456 = vmul.f32 %v455, 2.1237322e-06
      %v457 = vadd.f32 %v456, 0.00028619796
      %v458 = vmul.f32 %v455, %v457
      %v459 = vadd.f32 %v458, 0.0036580483
      %v460 = vmul.f32 %v455, %v459
      %v461 = vadd.f32 %v460, 0.05243302
      %v462 = vmul.f32 %v455, %v461
      %v463 = vadd.f32 %v462, 0.18741608
      %v464 = vmul.f32 %v455, %v463
      %v465 = vadd.f32 %v464, 1.1283791
      %v466 = vmul.f32 %v333, %v465
      %v467 = vmul.f32 %v455, 3.8918573e-05
      %v468 = vadd.f32 %v467, 0.001143296
      %v469 = vmul.f32 %v455, %v468
      %v470 = vadd.f32 %v469, 0.014752088
      %v471 = vmul.f32 %v455, %v470
      %v472 = vadd.f32 %v471, 0.112945676
      %v473 = vmul.f32 %v455, %v472
      %v474 = vadd.f32 %v473, 0.4994258
      %v475 = vmul.f32 %v455, %v474
      %v476 = vadd.f32 %v475, 1.0
      %v477 = vrcp.pop %v476
      %v478 = vmul.f32 %v476, %v477
      %v479 = vsub.f32 1.0, %v478
      %v480 = vmul.f32 %v477, %v479
      %v481 = vadd.f32 %v477, %v480
      %vm482 = vweird.f32 %v476
      %vm483 = vweird.f32 %v477
      %vm484 = vmor %vm482, %vm483
      %v485 = vsel %vm484, %v477, %v481
      %v486 = vand.u32 2147483647, %v476
      %vm487 = vcmp.eq.f32.partialorder %v486, 8.507059e+37
      %v488 = vand.u32 %v476, 2147483648
      %v489 = vor.u32 1.1754944e-38, %v488
      %v490 = vsel %vm487, %v489, %v485
      %v491 = vmul.f32 %v466, %v490
      %v492 = vmin.f32 %v491, 1.0
      %v493 = vmax.f32 %v492, -1.0
      %v494 = vadd.f32 %v373, 1.0
      %v495 = vadd.f32 %v413, 1.0
      %v496 = vadd.f32 %v453, 1.0
      %v497 = vadd.f32 %v493, 1.0
      %v498 = vmul.f32 %v326, %v494
      %v499 = vmul.f32 %v327, %v495
      %v500 = vmul.f32 %v328, %v496
      %v501 = vmul.f32 %v329, %v497
      %v502 = vpack.c.bf16 %v500, %v498
      %v503 = vpack.c.bf16 %v501, %v499
      %v505 = vperm.slane %v263, 0
      %v539 = vunpack.c.l.b16 %v231
      %v540 = vunpack.c.l.b16 %v232
      %v541 = vunpack.c.l.b16 %v233
      %v542 = vunpack.c.l.b16 %v234
      %v543 = vunpack.c.l.b16 %v235
      %v544 = vunpack.c.l.b16 %v236
      %v545 = vunpack.c.l.b16 %v237
      %v546 = vunpack.c.l.b16 %v238
      %v547 = vunpack.c.l.b16 %v239
      %v548 = vunpack.c.l.b16 %v240
      %v549 = vunpack.c.l.b16 %v241
      %v550 = vunpack.c.l.b16 %v242
      %v551 = vunpack.c.l.b16 %v243
      %v552 = vunpack.c.l.b16 %v244
      %v553 = vunpack.c.l.b16 %v245
      %v554 = vunpack.c.l.b16 %v246
      %v555 = vunpack.c.l.b16 %v247
      %v556 = vunpack.c.l.b16 %v248
      %v557 = vunpack.c.l.b16 %v249
      %v558 = vunpack.c.l.b16 %v250
      %v559 = vunpack.c.l.b16 %v251
      %v560 = vunpack.c.l.b16 %v252
      %v561 = vunpack.c.l.b16 %v253
      %v562 = vunpack.c.l.b16 %v254
      %v563 = vunpack.c.l.b16 %v255
      %v564 = vunpack.c.l.b16 %v256
      %v565 = vunpack.c.l.b16 %v257
      %v566 = vunpack.c.l.b16 %v258
      %v567 = vunpack.c.l.b16 %v259
      %v568 = vunpack.c.l.b16 %v260
      %v569 = vunpack.c.l.b16 %v261
      %v570 = vunpack.c.l.b16 %v262
      %v571 = vpack.c.b16 %v540, %v539
      %v572 = vpack.c.b16 %v542, %v541
      %v573 = vpack.c.b16 %v544, %v543
      %v574 = vpack.c.b16 %v546, %v545
      %v575 = vpack.c.b16 %v548, %v547
      %v576 = vpack.c.b16 %v550, %v549
      %v577 = vpack.c.b16 %v552, %v551
      %v578 = vpack.c.b16 %v554, %v553
      %v579 = vpack.c.b16 %v556, %v555
      %v580 = vpack.c.b16 %v558, %v557
      %v581 = vpack.c.b16 %v560, %v559
      %v582 = vpack.c.b16 %v562, %v561
      %v583 = vpack.c.b16 %v564, %v563
      %v584 = vpack.c.b16 %v566, %v565
      %v585 = vpack.c.b16 %v568, %v567
      %v586 = vpack.c.b16 %v570, %v569
      %603 = vmatpush.bf16.msra.mxu0 %v578
      %604 = vmatpush.bf16.msra.mxu0 %v577
      %605 = vmatpush.bf16.msra.mxu0 %v576
      %606 = vmatpush.bf16.msra.mxu0 %v575
      %607 = vmatpush.bf16.msra.mxu0 %v574
      %608 = vmatpush.bf16.msra.mxu0 %v573
      %609 = vmatpush.bf16.msra.mxu0 %v572
      %610 = vmatpush.bf16.msra.mxu0 %v571
      %611 = vmatmul.bf16.gmra.mxu0 %v502
      %v612 = vpop.f32.mrf.mxu0
      %v613 = vadd.f32 %v505, %v612
      %v614 = vpop.f32.mrf.mxu0
      %v615 = vadd.f32 %v505, %v614
      %616 = vdwg.mxu0
      %617 = vmatpush.bf16.msra.mxu0 %v586
      %618 = vmatpush.bf16.msra.mxu0 %v585
      %619 = vmatpush.bf16.msra.mxu0 %v584
      %620 = vmatpush.bf16.msra.mxu0 %v583
      %621 = vmatpush.bf16.msra.mxu0 %v582
      %622 = vmatpush.bf16.msra.mxu0 %v581
      %623 = vmatpush.bf16.msra.mxu0 %v580
      %624 = vmatpush.bf16.msra.mxu0 %v579
      %625 = vmatmul.bf16.gmra.mxu0 %v503
      %v626 = vpop.f32.mrf.mxu0
      %v627 = vadd.f32 %v613, %v626
      %v628 = vpop.f32.mrf.mxu0
      %v629 = vadd.f32 %v615, %v628
      %630 = vdwg.mxu0
      %v631 = vpack.c.bf16 %v627, %v627
      %v632 = vpack.c.bf16 %v629, %v629
      %v635 = vunpack.c.l.b16 %v631
      %v636 = vunpack.c.l.b16 %v632
      %v637 = vpack.c.b16 %v636, %v635
      %639 = vxpose.xlu0.c.b16.start [1/8] %v637, 128
      %640 = vxpose.xlu0.c.b16.cont [2/8] 0, 128
      %641 = vxpose.xlu0.c.b16.cont [3/8] 0, 128
      %642 = vxpose.xlu0.c.b16.cont [4/8] 0, 128
      %643 = vxpose.xlu0.c.b16.cont [5/8] 0, 128
      %644 = vxpose.xlu0.c.b16.cont [6/8] 0, 128
      %645 = vxpose.xlu0.c.b16.cont [7/8] 0, 128
      %646 = vxpose.xlu0.c.b16.end [8/8] 0, 128
      %v647 = vpop.trf.xlu0
      %v648 = vpop.trf.xlu0
      %v649 = vpop.trf.xlu0
      %v650 = vpop.trf.xlu0
      %v651 = vpop.trf.xlu0
      %v652 = vpop.trf.xlu0
      %v653 = vpop.trf.xlu0
      %v654 = vpop.trf.xlu0
      %vm656 = vcmask 130048
      %v658 = vsel %vm656, %v647, 0
      %660 = vmatpush.bf16.msra.mxu0 0
      %661 = vmatpush.bf16.msra.mxu0 0
      %662 = vmatpush.bf16.msra.mxu0 0
      %663 = vmatpush.bf16.msra.mxu0 0
      %664 = vmatpush.bf16.msra.mxu0 0
      %665 = vmatpush.bf16.msra.mxu0 0
      %666 = vmatpush.bf16.msra.mxu0 0
      %667 = vmatpush.bf16.msra.mxu0 %v273
      %668 = vmatmul.bf16.gmra.mxu0 %v658
      %v669 = vpop.f32.mrf.mxu0
      %v670 = vadd.f32 0.0, %v669
      %v671 = vpop.f32.mrf.mxu0
      %672 = vdwg.mxu0
      %v673 = vmul.f32 %v670, 0.0625
      %v674 = vrot.slane %v673, 4
      %vm675 = vcmask 1047556
      %v676 = vsel %vm675, 0.0, %v674
      %v678 = vunpack.c.l.s4 1983009808
      %v679 = vunpack.c.0.s8 %v678
      %v680 = vperm.slane %v673, %v679
      %v682 = vunpack.c.l.s4 1983009808
      %v683 = vunpack.c.0.s8 %v682
      %v684 = vperm.slane %v676, %v683
      %v685 = vrot.slane %v680, 4
      %v686 = vsel %vm675, 0.0, %v685
      %v688 = vunpack.c.l.s4 1934713408
      %v689 = vunpack.c.0.s8 %v688
      %v690 = vperm.slane %v680, %v689
      %v692 = vunpack.c.l.s4 1934713408
      %v693 = vunpack.c.0.s8 %v692
      %v694 = vperm.slane %v686, %v693
      %v695 = vrot.slane %v684, 4
      %v696 = vsel %vm675, 0.0, %v695
      %v698 = vunpack.c.l.s4 1934713408
      %v699 = vunpack.c.0.s8 %v698
      %v700 = vperm.slane %v684, %v699
      %v702 = vunpack.c.l.s4 1934713408
      %v703 = vunpack.c.0.s8 %v702
      %v704 = vperm.slane %v696, %v703
      %v705 = vrot.slane %v690, 4
      %v706 = vsel %vm675, 0.0, %v705
      %v707 = vrot.slane %v694, 4
      %v708 = vsel %vm675, 0.0, %v707
      %v709 = vrot.slane %v700, 4
      %v710 = vsel %vm675, 0.0, %v709
      %v711 = vrot.slane %v704, 4
      %v712 = vsel %vm675, 0.0, %v711
      %714 = vrot.lane.b32.xlu0 %v706, 32
      %v715 = vpop.permute.xlu0 %714
      %718 = vrot.lane.b32.xlu0 %v694, 64
      %v719 = vpop.permute.xlu0 %718
      %722 = vrot.lane.b32.xlu0 %v708, 96
      %v723 = vpop.permute.xlu0 %722
      %726 = vrot.lane.b32.xlu0 %v710, 32
      %v727 = vpop.permute.xlu0 %726
      %730 = vrot.lane.b32.xlu0 %v704, 64
      %v731 = vpop.permute.xlu0 %730
      %734 = vrot.lane.b32.xlu0 %v712, 96
      %v735 = vpop.permute.xlu0 %734
      %v737 = vsel %vm294, %v690, %v715
      %vm738 = vcmask 523264
      %v739 = vsel %vm738, %v737, %v719
      %vm740 = vcmask 785408
      %v741 = vsel %vm740, %v739, %v723
      %v742 = vsel %vm294, %v700, %v727
      %v743 = vsel %vm738, %v742, %v731
      %v744 = vsel %vm740, %v743, %v735
      %v747 = vrot.slane %v744, 7
      %vm748 = vcmask 1040384
      %v749 = vsel %vm748, %v741, %v747
      %v751 = vlaneseq
      %vm752 = vcmp.ge.s32.totalorder %v751, 0
      %vm753 = vcmp.lt.s32.totalorder %v751, 256
      %vm754 = vmand %vm752, %vm753
      %755 = vst.msk [vmem:[%s222] sm:$0x3] %vm754, %v749
      %p756 = scmp.lt.s32.totalorder %s16, 1
      %s757 = scalar_select %p756, %s16, 1
      %s758 = smul.addr %s757, 2
      %s759 = scalar_lea.vmem %s5, %s758
      // Predicated region
      $region41: #{token_learner.1} parent=39 // pred_check
        %p760 = pneg %p144
      $region42: #{token_learner.1} parent=39 // pred_check_branch
        %762 = sbr.rel (%p760) target = $region44
      $region43: #{token_learner.1} parent=39 // pred_region
        _
      $region44: #{token_learner.1} parent=39 // pred_fallthru
        _
    $region40: #{token_learner.1} parent=5 // pred_fallthru
      _
    %p763 = scmp.le.s32.totalorder 2, %s11
    // Predicated region
    $region45: #{token_learner.1} parent=5 // pred_check
      %p764 = pneg %p763
    $region46: #{token_learner.1} parent=5 // pred_check_branch
      %766 = sbr.rel (%p764) target = $region48
    $region47: #{token_learner.1} parent=5 // pred_region
      %s767 = ssub.s32 %s11, 2
      // Predicated region
      $region49: #{token_learner.1} parent=47 // pred_check
        %p768 = pneg %p150
      $region50: #{token_learner.1} parent=47 // pred_check_branch
        %770 = sbr.rel (%p768) target = $region52
      $region51: #{token_learner.1} parent=47 // pred_region
        %p771 = scmp.lt.s32.totalorder %s17, 1
        %s772 = scalar_select %p771, %s17, 1
        %s773 = smul.addr %s772, 2
        %s774 = scalar_lea.vmem %s5, %s773
      $region52: #{token_learner.1} parent=47 // pred_fallthru
        _
    $region48: #{token_learner.1} parent=5 // pred_fallthru
      _
  $region6: #{token_learner.1} parent=0 // loop_footer
    %s15 = sadd.s32 1, %s11
  $region7: #{token_learner.1} parent=0 // loop_footer_branch
    %10 = sbr.rel target = $region3
  $region8: #{token_learner.1} parent=0 // loop_exit
    _

</llo_original>
